<compile_context>
chip_gen: v5e
topology: v5e:2x2
jax: 0.10.0
libtpu: 0.0.40
codegen_flags: <defaults>
</compile_context>

<pallas_src>
import functools
import math

import jax
import jax.numpy as jnp
from jax.experimental import pallas as pl
from jax.experimental.pallas import tpu as pltpu

LN_EPS = 1e-5  # torch.nn.LayerNorm default

# Matmul tile caps (v6e/v7x friendly; on v5e prefer MM_TN=128 -- harmless here
# because every N in this model is <= 256 so tn collapses to the full dim).
MM_TM, MM_TN, MM_TK = 256, 256, 512


def _round_up(x, m):
    return ((x + m - 1) // m) * m


# ----------------------------------------------------------------------------
# Fused matmul kernel:  o = [LN_K](a) @ b [+ bias] [+ residual]
# ----------------------------------------------------------------------------
def _make_mm_kernel(has_ln, has_bias, has_res):
    def kernel(*refs):
        it = iter(refs)
        a_ref = next(it)
        b_ref = next(it)
        g_ref = bt_ref = bias_ref = res_ref = None
        if has_ln:
            g_ref, bt_ref = next(it), next(it)
        if has_bias:
            bias_ref = next(it)
        if has_res:
            res_ref = next(it)
        o_ref = next(it)
        acc_ref = next(it)

        @pl.when(pl.program_id(2) == 0)
        def _init():
            acc_ref[...] = jnp.zeros_like(acc_ref)

        a = a_ref[...]
        if has_ln:
            # LayerNorm over the (fully resident) K axis as a matmul prologue.
            x = a.astype(jnp.float32)
            mean = jnp.mean(x, axis=-1, keepdims=True)
            xc = x - mean
            var = jnp.mean(xc * xc, axis=-1, keepdims=True)
            inv = jax.lax.rsqrt(var + LN_EPS)
            a = xc * inv * g_ref[...] + bt_ref[...]
        a = a.astype(jnp.bfloat16)
        acc_ref[...] += jnp.dot(a, b_ref[...], preferred_element_type=jnp.float32)

        @pl.when(pl.program_id(2) == pl.num_programs(2) - 1)
        def _flush():
            r = acc_ref[...]
            if has_bias:
                r = r + bias_ref[...]
            if has_res:
                r = r + res_ref[...].astype(jnp.float32)
            o_ref[...] = r.astype(o_ref.dtype)

    return kernel


def matmul_fused(a, b, bias=None, ln=None, residual=None, out_dtype=jnp.float32):
    """o = LN(a) @ b + bias + residual.

    a: (M, K), b: (K, N), bias: (N,) or None, ln: (gamma, beta) over K or None,
    residual: (M, N) or None.  bf16 MXU inputs, f32 accumulation."""
    M, K = a.shape
    K2, N = b.shape
    assert K == K2

    if ln is not None and K > MM_TK:
        # K does not fit in one tile: fall back to a standalone LN pass.
        a = layernorm_lastdim(a, ln[0], ln[1], out_dtype=jnp.bfloat16)
        ln = None
    has_ln = ln is not None
    has_bias = bias is not None
    has_res = residual is not None

    tm = min(MM_TM, _round_up(M, 8))
    tk = K if K <= MM_TK else MM_TK           # no K zero-padding for small K
    tn = N if N <= MM_TN else MM_TN           # no N zero-padding for small N
    Mp, Kp, Np = _round_up(M, tm), _round_up(K, tk), _round_up(N, tn)

    a_p = a if has_ln else a.astype(jnp.bfloat16)   # keep f32 when LN is fused
    if (Mp, Kp) != (M, K):
        a_p = jnp.pad(a_p, ((0, Mp - M), (0, Kp - K)))
    b_p = b.astype(jnp.bfloat16)
    if (Kp, Np) != (K, N):
        b_p = jnp.pad(b_p, ((0, Kp - K), (0, Np - N)))

    operands = [a_p, b_p]
    in_specs = [pl.BlockSpec((tm, tk), lambda i, j, k: (i, k)),
                pl.BlockSpec((tk, tn), lambda i, j, k: (k, j))]
    if has_ln:
        operands += [ln[0].reshape(1, K).astype(jnp.float32),
                     ln[1].reshape(1, K).astype(jnp.float32)]
        in_specs += [pl.BlockSpec((1, tk), lambda i, j, k: (0, k)),
                     pl.BlockSpec((1, tk), lambda i, j, k: (0, k))]
    if has_bias:
        bias_p = bias.reshape(1, N).astype(jnp.float32)
        if Np != N:
            bias_p = jnp.pad(bias_p, ((0, 0), (0, Np - N)))
        operands.append(bias_p)
        in_specs.append(pl.BlockSpec((1, tn), lambda i, j, k: (0, j)))
    if has_res:
        r_p = residual.astype(jnp.float32)
        if (Mp, Np) != (M, N):
            r_p = jnp.pad(r_p, ((0, Mp - M), (0, Np - N)))
        operands.append(r_p)
        in_specs.append(pl.BlockSpec((tm, tn), lambda i, j, k: (i, j)))

    out = pl.pallas_call(
        _make_mm_kernel(has_ln, has_bias, has_res),
        out_shape=jax.ShapeDtypeStruct((Mp, Np), out_dtype),
        grid_spec=pltpu.PrefetchScalarGridSpec(
            num_scalar_prefetch=0,
            grid=(Mp // tm, Np // tn, Kp // tk),
            in_specs=in_specs,
            out_specs=pl.BlockSpec((tm, tn), lambda i, j, k: (i, j)),
            scratch_shapes=[pltpu.VMEM((tm, tn), jnp.float32)]),
        compiler_params=pltpu.CompilerParams(
            dimension_semantics=("parallel", "parallel", "arbitrary")),
    )(*operands)
    return out[:M, :N] if (Mp, Np) != (M, N) else out


# ----------------------------------------------------------------------------
# Standalone LayerNorm (only where the output feeds >1 consumer / is the
# residual stream: merge_ln, ln1, final stage norm)
# ----------------------------------------------------------------------------
def _layernorm_kernel(x_ref, g_ref, b_ref, o_ref):
    x = x_ref[...].astype(jnp.float32)
    mean = jnp.mean(x, axis=-1, keepdims=True)
    xc = x - mean
    var = jnp.mean(xc * xc, axis=-1, keepdims=True)
    inv = jax.lax.rsqrt(var + LN_EPS)
    o_ref[...] = (xc * inv * g_ref[...] + b_ref[...]).astype(o_ref.dtype)


def layernorm_lastdim(x2d, gamma, beta, out_dtype=jnp.float32, tr=1024):
    R, C = x2d.shape
    tr = min(tr, _round_up(R, 8))
    Rp = _round_up(R, tr)
    xp = x2d if Rp == R else jnp.pad(x2d, ((0, Rp - R), (0, 0)))
    out = pl.pallas_call(
        _layernorm_kernel,
        out_shape=jax.ShapeDtypeStruct((Rp, C), out_dtype),
        grid=(Rp // tr,),
        in_specs=[pl.BlockSpec((tr, C), lambda i: (i, 0)),
                  pl.BlockSpec((1, C), lambda i: (0, 0)),
                  pl.BlockSpec((1, C), lambda i: (0, 0))],
        out_specs=pl.BlockSpec((tr, C), lambda i: (i, 0)),
        compiler_params=pltpu.CompilerParams(dimension_semantics=("parallel",)),
    )(xp, gamma.reshape(1, C).astype(jnp.float32),
      beta.reshape(1, C).astype(jnp.float32))
    return out[:R] if Rp != R else out


def layernorm2d(x_nhwc, gamma, beta, out_dtype=jnp.float32):
    B, H, W, C = x_nhwc.shape
    y = layernorm_lastdim(x_nhwc.reshape(B * H * W, C), gamma, beta,
                          out_dtype=out_dtype)
    return y.reshape(B, H, W, C)


# ----------------------------------------------------------------------------
# Multi-head attention kernel: q (B,N,C), fused kv (B,M,2C) -> o (B,N,C).
# Heads are handled inside the kernel with static lane slices -> no host-side
# head transposes.
# ----------------------------------------------------------------------------
def _mha_kernel(q_ref, kv_ref, o_ref, *, scale, num_heads, d, C):
    q = q_ref[...]
    kv = kv_ref[...]
    for h in range(num_heads):
        qh = q[:, h * d:(h + 1) * d]
        kh = kv[:, h * d:(h + 1) * d]
        vh = kv[:, C + h * d:C + (h + 1) * d]
        s = jax.lax.dot_general(qh, kh, (((1,), (1,)), ((), ())),
                                preferred_element_type=jnp.float32) * scale
        s = s - jnp.max(s, axis=-1, keepdims=True)
        p = jnp.exp(s)
        inv = pl.reciprocal(jnp.sum(p, axis=-1, keepdims=True), approx=True)
        oh = jnp.dot(p.astype(vh.dtype), vh,
                     preferred_element_type=jnp.float32) * inv
        o_ref[:, h * d:(h + 1) * d] = oh.astype(o_ref.dtype)


def mha_attention(q, kv, num_heads, out_dtype=jnp.bfloat16, tq=256):
    B, N, C = q.shape
    M = kv.shape[1]
    assert C % num_heads == 0
    d = C // num_heads
    tq = min(tq, _round_up(N, 8))
    Np = _round_up(N, tq)
    qb = q.astype(jnp.bfloat16)
    if Np != N:
        qb = jnp.pad(qb, ((0, 0), (0, Np - N), (0, 0)))
    kvb = kv.astype(jnp.bfloat16)
    kern = functools.partial(_mha_kernel, scale=1.0 / math.sqrt(d),
                             num_heads=num_heads, d=d, C=C)
    out = pl.pallas_call(
        kern,
        out_shape=jax.ShapeDtypeStruct((B, Np, C), out_dtype),
        grid=(B, Np // tq),
        in_specs=[pl.BlockSpec((None, tq, C), lambda b, i: (b, i, 0)),
                  pl.BlockSpec((None, M, 2 * C), lambda b, i: (b, 0, 0))],
        out_specs=pl.BlockSpec((None, tq, C), lambda b, i: (b, i, 0)),
        compiler_params=pltpu.CompilerParams(
            dimension_semantics=("parallel", "parallel")),
    )(qb, kvb)
    return out[:, :N] if Np != N else out


# ----------------------------------------------------------------------------
# Depthwise 3x3 conv (groups=C, out=C*E) + bias + GELU(tanh approx)
# ----------------------------------------------------------------------------
def _gelu_tanh(x):
    # tanh-approx GELU (EUP tanh); tiny deviation from PyTorch's exact-erf GELU.
    c0 = 0.7978845608028654  # sqrt(2/pi)
    return 0.5 * x * (1.0 + jnp.tanh(c0 * (x + 0.044715 * (x * x * x))))


def _dwconv3x3_gelu_kernel(x_ref, w_ref, b_ref, o_ref, *, th, W, E, C):
    # x_ref: (th+2, W+2, C) halo'd row band; w_ref: (E, 9, C); b_ref: (E, 1, C)
    # o_ref: (th, W, E*C) hidden activation, E-major channel layout.
    xp = x_ref[...].astype(jnp.float32)
    w = w_ref[...]
    bv = b_ref[...]
    for e in range(E):
        acc = jnp.zeros((th, W, C), jnp.float32)
        for t in range(9):
            i, j = t // 3, t % 3
            acc = acc + xp[i:i + th, j:j + W, :] * w[e, t]
        # direct static-slice store -- no in-kernel concatenate buffer
        o_ref[:, :, e * C:(e + 1) * C] = _gelu_tanh(acc + bv[e]).astype(o_ref.dtype)


def dwconv3x3_gelu(x_nhwc, w, b, expansion, out_dtype=jnp.bfloat16, th_max=64):
    """Depthwise (groups=C) 3x3 conv, out_channels=C*E, pad=1, + bias + GELU.

    Output channel layout is E-major (index = e*C + c); the following 1x1-conv
    weights are permuted accordingly, so the math matches PyTorch's grouped
    conv ordering (o = c*E + e)."""
    # TODO(synk): lane-dense re-layout ((th+2, (W+2)*C) + pltpu.roll taps) to
    # raise VPU lane utilization for small C.
    B, H, W, C = x_nhwc.shape
    E = expansion
    CE = C * E
    th = min(th_max, H)
    nb = pl.cdiv(H, th)
    Hp = nb * th
    xb = x_nhwc.astype(jnp.bfloat16)
    xp = jnp.pad(xb, ((0, 0), (1, Hp - H + 1), (1, 1), (0, 0)))
    if nb == 1:
        bands = xp                                   # (B, th+2, W+2, C): no host copy
    else:
        # TODO(synk): express the 2-row halo with a pl.Element H-axis BlockSpec
        # instead of materializing overlapping bands on the host.
        bands = jnp.stack([xp[:, r * th: r * th + th + 2] for r in range(nb)],
                          axis=1).reshape(B * nb, th + 2, W + 2, C)
    # weights (CE,1,3,3) with o = c*E+e  ->  (E, 9, C)
    w_r = jnp.transpose(w.reshape(C, E, 9), (1, 2, 0)).astype(jnp.float32)
    b_r = jnp.transpose(b.reshape(C, E), (1, 0)).reshape(E, 1, C).astype(jnp.float32)
    kern = functools.partial(_dwconv3x3_gelu_kernel, th=th, W=W, E=E, C=C)
    out = pl.pallas_call(
        kern,
        out_shape=jax.ShapeDtypeStruct((B * nb, th, W, CE), out_dtype),
        grid=(B * nb,),
        in_specs=[pl.BlockSpec((None, th + 2, W + 2, C), lambda i: (i, 0, 0, 0)),
                  pl.BlockSpec((E, 9, C), lambda i: (0, 0, 0)),
                  pl.BlockSpec((E, 1, C), lambda i: (0, 0, 0))],
        out_specs=pl.BlockSpec((None, th, W, CE), lambda i: (i, 0, 0, 0)),
        compiler_params=pltpu.CompilerParams(dimension_semantics=("parallel",)),
    )(bands, w_r, b_r)
    out = out.reshape(B, Hp, W, CE)
    return out[:, :H] if Hp != H else out


# ----------------------------------------------------------------------------
# Convolutions expressed as (space-to-depth / im2col) + fused Pallas matmul
# ----------------------------------------------------------------------------
def conv2d_im2col(x_nhwc, w, b, stride, padding, out_dtype=jnp.float32):
    """Strided conv via im2col + fused Pallas matmul.  w: (O, Cin, kh, kw)."""
    # TODO(synk): form im2col columns per output row-tile inside a Pallas kernel
    # to avoid the kh*kw-fold HBM duplication for the 7x7 patch-merging stem.
    B, H, W, Cin = x_nhwc.shape
    O, _, kh, kw = w.shape
    xb = x_nhwc.astype(jnp.bfloat16)
    xp = jnp.pad(xb, ((0, 0), (padding, padding), (padding, padding), (0, 0)))
    Ho = (H + 2 * padding - kh) // stride + 1
    Wo = (W + 2 * padding - kw) // stride + 1
    cols = []
    for i in range(kh):
        for j in range(kw):
            cols.append(xp[:, i:i + stride * (Ho - 1) + 1:stride,
                           j:j + stride * (Wo - 1) + 1:stride, :])
    cols = jnp.concatenate(cols, axis=-1)            # order (i, j, cin)
    a = cols.reshape(B * Ho * Wo, kh * kw * Cin)
    w_mat = jnp.transpose(w, (2, 3, 1, 0)).reshape(kh * kw * Cin, O)
    out = matmul_fused(a, w_mat, b, out_dtype=out_dtype)
    return out.reshape(B, Ho, Wo, O)


def reduce_conv(x_nhwc, w, b, r, out_dtype=jnp.float32):
    """Conv2d(C, C, kernel=r, stride=r, pad=0) via space-to-depth + matmul."""
    B, H, W, C = x_nhwc.shape
    Ho, Wo = H // r, W // r
    x = x_nhwc[:, :Ho * r, :Wo * r, :]
    cols = x.reshape(B, Ho, r, Wo, r, C).transpose(0, 1, 3, 2, 4, 5)
    a = cols.reshape(B * Ho * Wo, r * r * C)          # order (i, j, cin)
    w_mat = jnp.transpose(w, (2, 3, 1, 0)).reshape(r * r * C, C)
    out = matmul_fused(a, w_mat, b, out_dtype=out_dtype)
    return out.reshape(B, Ho, Wo, C)


# ----------------------------------------------------------------------------
# SegFormer blocks
# ----------------------------------------------------------------------------
def efficient_mha(x_ln, p, num_heads, reduction_ratio, residual):
    """x_ln: LayerNorm'd input (B,H,W,C) bf16.  Returns residual + attention."""
    B, H, W, C = x_ln.shape
    N = H * W
    x_seq = x_ln.reshape(B * N, C)

    # reducer: Conv2d(C, C, k=r, stride=r) -- its LayerNorm is fused into the
    # KV projection below.
    red_pre = reduce_conv(x_ln, p['red_w'], p['red_b'], reduction_ratio,
                          out_dtype=jnp.float32)
    Hr, Wr = red_pre.shape[1], red_pre.shape[2]
    M = Hr * Wr

    Wq, W_kv = p['in_proj_w'][:C], p['in_proj_w'][C:]
    bq, b_kv = p['in_proj_b'][:C], p['in_proj_b'][C:]
    q = matmul_fused(x_seq, Wq.T, bq, out_dtype=jnp.bfloat16).reshape(B, N, C)
    kv = matmul_fused(red_pre.reshape(B * M, C), W_kv.T, b_kv,
                      ln=(p['red_ln_g'], p['red_ln_b']),
                      out_dtype=jnp.bfloat16).reshape(B, M, 2 * C)

    o = mha_attention(q, kv, num_heads)                       # (B, N, C) bf16
    out = matmul_fused(o.reshape(B * N, C), p['out_proj_w'].T, p['out_proj_b'],
                       residual=residual.reshape(B * N, C))    # fused residual add
    return out.reshape(B, H, W, C)


def mix_mlp(x, p, expansion):
    """ResidualAdd(LayerNorm2d -> MixMLP -> StochasticDepth(p=0) == identity)."""
    B, H, W, C = x.shape
    CE = C * expansion
    x2d = x.reshape(B * H * W, C)
    # ln2 fused into the c1 matmul (LN prologue on the A tile)
    h1 = matmul_fused(x2d, p['c1_w'].reshape(C, C).T, p['c1_b'],
                      ln=(p['ln2_g'], p['ln2_b']),
                      out_dtype=jnp.bfloat16).reshape(B, H, W, C)
    h2 = dwconv3x3_gelu(h1, p['dw_w'], p['dw_b'], expansion)   # bf16, E-major layout
    # Permute 1x1-conv weight columns to the E-major hidden layout used by h2:
    # w3_perm[:, e*C + c] = c3_w[:, c*E + e]
    w3 = p['c3_w'].reshape(C, C, expansion).transpose(0, 2, 1).reshape(C, CE)
    out = matmul_fused(h2.reshape(B * H * W, CE), w3.T, p['c3_b'],
                       residual=x2d)                            # fused residual add
    return out.reshape(B, H, W, C)


def encoder_block(x, p, num_heads, reduction_ratio, expansion):
    # ResidualAdd(LayerNorm2d -> EfficientMultiHeadAttention)
    x_ln = layernorm2d(x, p['ln1_g'], p['ln1_b'], out_dtype=jnp.bfloat16)
    x = efficient_mha(x_ln, p, num_heads, reduction_ratio, residual=x)
    # ResidualAdd(LayerNorm2d -> MixMLP), LN and residual fused into the matmuls
    x = mix_mlp(x, p, expansion)
    return x


def stage_forward(x, sp, cfg):
    x = conv2d_im2col(x, sp['patch_w'], None,
                      stride=cfg['overlap'], padding=cfg['patch'] // 2)
    x = layernorm2d(x, sp['merge_ln_g'], sp['merge_ln_b'])
    for bp in sp['blocks']:
        x = encoder_block(x, bp, cfg['heads'], cfg['rr'], cfg['exp'])
    x = layernorm2d(x, sp['ln_g'], sp['ln_b'])
    return x


def segformer_encoder(x_nchw, params, cfgs):
    """Returns list of NCHW feature maps (one per stage), matching PyTorch."""
    x = jnp.transpose(x_nchw, (0, 2, 3, 1))            # NCHW -> NHWC internal layout
    feats = []
    for sp, cfg in zip(params, cfgs):
        x = stage_forward(x, sp, cfg)
        feats.append(jnp.transpose(x, (0, 3, 1, 2)))   # back to NCHW like PyTorch
    return feats


# ----------------------------------------------------------------------------
# Deterministic parameter initialization (shapes follow the module's __init__)
# ----------------------------------------------------------------------------
def init_params(key, in_channels, widths, depths, all_num_heads,
                patch_sizes, overlap_sizes, reduction_ratios, mlp_expansions):
    kiter = iter(jax.random.split(key, 256))
    nxt = lambda: next(kiter)

    def nrm(shape, scale=0.05):
        return jax.random.normal(nxt(), shape, dtype=jnp.float32) * scale

    params, cfgs = [], []
    cin = in_channels
    for s, C in enumerate(widths):
        p_sz, E, r = patch_sizes[s], mlp_expansions[s], reduction_ratios[s]
        ones = lambda: jnp.ones((C,), jnp.float32)
        zeros = lambda: jnp.zeros((C,), jnp.float32)
        sp = {
            'patch_w': nrm((C, cin, p_sz, p_sz)),      # OverlapPatchMerging conv (no bias)
            'merge_ln_g': ones(), 'merge_ln_b': zeros(),
            'blocks': [],
            'ln_g': ones(), 'ln_b': zeros(),
        }
        for _ in range(depths[s]):
            sp['blocks'].append({
                'ln1_g': ones(), 'ln1_b': zeros(),
                'red_w': nrm((C, C, r, r)), 'red_b': nrm((C,)),
                'red_ln_g': ones(), 'red_ln_b': zeros(),
                'in_proj_w': nrm((3 * C, C)), 'in_proj_b': nrm((3 * C,)),
                'out_proj_w': nrm((C, C)), 'out_proj_b': nrm((C,)),
                'ln2_g': ones(), 'ln2_b': zeros(),
                'c1_w': nrm((C, C, 1, 1)), 'c1_b': nrm((C,)),
                'dw_w': nrm((C * E, 1, 3, 3)), 'dw_b': nrm((C * E,)),
                'c3_w': nrm((C, C * E, 1, 1)), 'c3_b': nrm((C,)),
            })
        params.append(sp)
        cfgs.append(dict(patch=p_sz, overlap=overlap_sizes[s],
                         heads=all_num_heads[s], rr=r, exp=E))
        cin = C
    return params, cfgs


if __name__ == "__main__":
    # Small SegFormer config: 2 stages.
    in_channels = 3
    widths = [16, 32]
    depths = [1, 1]
    all_num_heads = [1, 2]
    patch_sizes = [7, 3]
    overlap_sizes = [4, 2]
    reduction_ratios = [4, 2]
    mlp_expansions = [2, 2]
    # drop_prob = 0.0 -> StochasticDepth is the identity (also identity in eval mode).

    kp, kx = jax.random.split(jax.random.PRNGKey(0))
    params, cfgs = init_params(kp, in_channels, widths, depths, all_num_heads,
                               patch_sizes, overlap_sizes, reduction_ratios,
                               mlp_expansions)
    x = jax.random.normal(kx, (2, 3, 16, 16), dtype=jnp.float32)   # NCHW like PyTorch

    feats = segformer_encoder(x, params, cfgs)
    feats = jax.block_until_ready(feats)

    assert feats[0].shape == (2, 16, 4, 4), feats[0].shape
    assert feats[1].shape == (2, 32, 2, 2), feats[1].shape
    assert all(bool(jnp.all(jnp.isfinite(f))) for f in feats)
    print("KERNEL_OK")
</pallas_src>

<mosaic_0001>
module attributes {stable_mosaic.version = 11 : i64} {
  func.func @kernel(%arg0: i32, %arg1: i32, %arg2: i32, %arg3: memref<32x147xbf16, #tpu.memory_space<vmem>>, %arg4: memref<147x16xbf16, #tpu.memory_space<vmem>>, %arg5: memref<32x16xf32, #tpu.memory_space<vmem>>, %arg6: memref<32x16xf32, #tpu.memory_space<vmem>>) attributes {dimension_semantics = [#tpu.dimension_semantics<parallel>, #tpu.dimension_semantics<parallel>, #tpu.dimension_semantics<arbitrary>], iteration_bounds = array<i64: 1, 1, 1>, scalar_prefetch = 0 : i64, scratch_operands = 1 : i64, tpu.core_type = #tpu.core_type<tc>, window_params = [{transform_indices = @transform_0, window_bounds = array<i64: 32, 147>}, {transform_indices = @transform_1, window_bounds = array<i64: 147, 16>}, {transform_indices = @transform_2, window_bounds = array<i64: 32, 16>}]} {
    %c0_i32 = arith.constant 0 : i32
    %0 = arith.cmpi eq, %arg2, %c0_i32 : i32
    %1 = arith.extui %0 : i1 to i32
    %c0_i32_0 = arith.constant 0 : i32
    %2 = arith.cmpi ne, %1, %c0_i32_0 : i32
    scf.if %2 {
      %cst_10 = arith.constant 0.000000e+00 : f32
      %12 = vector.broadcast %cst_10 : f32 to vector<32x16xf32>
      %c0_11 = arith.constant 0 : index
      %c0_12 = arith.constant 0 : index
      %13 = vector.load %arg6[%c0_11, %c0_12] : memref<32x16xf32, #tpu.memory_space<vmem>>, vector<32x16xf32>
      tpu.vector_store %arg6[%c0_11, %c0_12], %12 {strides = array<i32>} : memref<32x16xf32, #tpu.memory_space<vmem>>, vector<32x16xf32>,
    } else {
    }
    %c0 = arith.constant 0 : index
    %c0_1 = arith.constant 0 : index
    %3 = vector.load %arg3[%c0, %c0_1] : memref<32x147xbf16, #tpu.memory_space<vmem>>, vector<32x147xbf16>
    %c0_2 = arith.constant 0 : index
    %c0_3 = arith.constant 0 : index
    %4 = vector.load %arg6[%c0_2, %c0_3] : memref<32x16xf32, #tpu.memory_space<vmem>>, vector<32x16xf32>
    %c0_4 = arith.constant 0 : index
    %c0_5 = arith.constant 0 : index
    %5 = vector.load %arg4[%c0_4, %c0_5] : memref<147x16xbf16, #tpu.memory_space<vmem>>, vector<147x16xbf16>
    %cst = arith.constant dense<0.000000e+00> : vector<32x16xf32>
    %6 = tpu.matmul %3, %5, %cst {dimension_numbers = #tpu.dot_dimension_numbers<[1], [0], [0], [1], [0, 0, 1, 1], [], []>} : vector<32x147xbf16>, vector<147x16xbf16>, vector<32x16xf32> -> vector<32x16xf32>
    %7 = arith.addf %4, %6 : vector<32x16xf32>
    %c0_6 = arith.constant 0 : index
    %c0_7 = arith.constant 0 : index
    %8 = vector.load %arg6[%c0_6, %c0_7] : memref<32x16xf32, #tpu.memory_space<vmem>>, vector<32x16xf32>
    tpu.vector_store %arg6[%c0_6, %c0_7], %7 {strides = array<i32>} : memref<32x16xf32, #tpu.memory_space<vmem>>, vector<32x16xf32>,
    %c0_i32_8 = arith.constant 0 : i32
    %9 = arith.cmpi eq, %arg2, %c0_i32_8 : i32
    %10 = arith.extui %9 : i1 to i32
    %c0_i32_9 = arith.constant 0 : i32
    %11 = arith.cmpi ne, %10, %c0_i32_9 : i32
    scf.if %11 {
      %c0_10 = arith.constant 0 : index
      %c0_11 = arith.constant 0 : index
      %12 = vector.load %arg6[%c0_10, %c0_11] : memref<32x16xf32, #tpu.memory_space<vmem>>, vector<32x16xf32>
      %c0_12 = arith.constant 0 : index
      %c0_13 = arith.constant 0 : index
      %13 = vector.load %arg5[%c0_12, %c0_13] : memref<32x16xf32, #tpu.memory_space<vmem>>, vector<32x16xf32>
      tpu.vector_store %arg5[%c0_12, %c0_13], %12 {strides = array<i32>} : memref<32x16xf32, #tpu.memory_space<vmem>>, vector<32x16xf32>,
    } else {
    }
    return
  }
  func.func @transform_0(%arg0: i32, %arg1: i32, %arg2: i32) -> (i32, i32) {
    %c0_i32 = arith.constant 0 : i32
    return %arg0, %arg2 : i32, i32
  }
  func.func @transform_1(%arg0: i32, %arg1: i32, %arg2: i32) -> (i32, i32) {
    %c0_i32 = arith.constant 0 : i32
    return %arg2, %arg1 : i32, i32
  }
  func.func @transform_2(%arg0: i32, %arg1: i32, %arg2: i32) -> (i32, i32) {
    %c0_i32 = arith.constant 0 : i32
    return %arg0, %arg1 : i32, i32
  }
}

</mosaic_0001>

<llo_original>
// kernel: tpu_custom_call.1
$region0: #{tpu_custom_call.1}
  #allocation0 [shape = 'u32[]', space=smem, size = 0x4, offset = 0x4, fixed_abs, tag = 'smem constant byte address 0x4 - core index']
  #allocation1 [shape = 'u32[72,128]{1,0:T(1,128)}', space=vmem, size = 0x9000, scoped, tag = 'internal scratch']
  #allocation2 [shape = 'f32[32,16]{1,0:T(8,128)}', space=vmem, size = 0x4000, scoped, tag = 'scratch operand']
  %s0 = inlined_call_operand.vmem [shape: bf16[32,147], index: 0, kind: input, shape index: {}]
  %s1 = inlined_call_operand.vmem [shape: bf16[147,16], index: 1, kind: input, shape index: {}]
  %s2 = inlined_call_operand.vmem [shape: f32[32,16], index: 2, kind: output, shape index: {}]
  %s3 = sld [smem:[#allocation0]]
  $region26: #{tpu_custom_call.1} parent=0
    _
  %s5 = ssub.s32 1, %s3
  %s6 = scalar_select 0, %s5, %s3
  // Predicated region
  $region2: #{tpu_custom_call.1} parent=0 // pred_check
    _
  $region3: #{tpu_custom_call.1} parent=0 // pred_check_branch
    %8 = sbr.rel (0) target = $region5
  $region4: #{tpu_custom_call.1} parent=0 // pred_region
    _
  $region5: #{tpu_custom_call.1} parent=0 // pred_fallthru
    _
  // Predicated region
  $region6: #{tpu_custom_call.1} parent=0 // pred_check
    _
  $region7: #{tpu_custom_call.1} parent=0 // pred_check_branch
    %10 = sbr.rel (0) target = $region9
  $region8: #{tpu_custom_call.1} parent=0 // pred_region
    _
  $region9: #{tpu_custom_call.1} parent=0 // pred_fallthru
    _
  %p12 = scmp.eq.s32.totalorder 0, 0
  // Predicated region
  $region10: #{tpu_custom_call.1} parent=0 // pred_check
    %p13 = pneg %p12
  $region11: #{tpu_custom_call.1} parent=0 // pred_check_branch
    %15 = sbr.rel (%p13) target = $region13
  $region12: #{tpu_custom_call.1} parent=0 // pred_region
    %vm16 = vcmask 130048
    %17 = vst.msk [vmem:[#allocation2] sm:$0xff] %vm16, 0.0
    %18 = vst.msk [vmem:[#allocation2 + $0x8] sm:$0xff] %vm16, 0.0
    %19 = vst.msk [vmem:[#allocation2 + $0x10] sm:$0xff] %vm16, 0.0
    %20 = vst.msk [vmem:[#allocation2 + $0x18] sm:$0xff] %vm16, 0.0
  $region13: #{tpu_custom_call.1} parent=0 // pred_fallthru
    _
  %v21 = vld [vmem:[%s0] sm:$0xff]
  %v22 = vld [vmem:[%s0 + $0x8] sm:$0xff]
  %v23 = vld [vmem:[%s0 + $0x10] sm:$0xff]
  %v24 = vld [vmem:[%s0 + $0x18] sm:$0xff]
  %v25 = vld [vmem:[#allocation2] sm:$0xff]
  %v26 = vld [vmem:[#allocation2 + $0x8] sm:$0xff]
  %v27 = vld [vmem:[#allocation2 + $0x10] sm:$0xff]
  %v28 = vld [vmem:[#allocation2 + $0x18] sm:$0xff]
  %v29 = vld [vmem:[%s1] sm:$0xf]
  %v30 = vld [vmem:[%s1 + $0x4] sm:$0xf]
  %v31 = vld [vmem:[%s1 + $0x8] sm:$0xf]
  %v32 = vld [vmem:[%s1 + $0xc] sm:$0xf]
  %v33 = vld [vmem:[%s1 + $0x10] sm:$0xf]
  %v34 = vld [vmem:[%s1 + $0x14] sm:$0xf]
  %v35 = vld [vmem:[%s1 + $0x18] sm:$0xf]
  %v36 = vld [vmem:[%s1 + $0x1c] sm:$0xf]
  %v37 = vld [vmem:[%s1 + $0x20] sm:$0xf]
  %v38 = vld [vmem:[%s1 + $0x24] sm:$0xf]
  %v39 = vld [vmem:[%s1 + $0x28] sm:$0xf]
  %v40 = vld [vmem:[%s1 + $0x2c] sm:$0xf]
  %v41 = vld [vmem:[%s1 + $0x30] sm:$0xf]
  %v42 = vld [vmem:[%s1 + $0x34] sm:$0xf]
  %v43 = vld [vmem:[%s1 + $0x38] sm:$0xf]
  %v44 = vld [vmem:[%s1 + $0x3c] sm:$0xf]
  %v45 = vld [vmem:[%s1 + $0x40] sm:$0xf]
  %v46 = vld [vmem:[%s1 + $0x44] sm:$0xf]
  %v47 = vld [vmem:[%s1 + $0x48] sm:$0x3]
  %v52 = vunpack.c.l.b16 %v21
  %v53 = vunpack.c.h.b16 %v21
  %v54 = vunpack.c.l.b16 %v22
  %v55 = vunpack.c.h.b16 %v22
  %v56 = vunpack.c.l.b16 %v23
  %v57 = vunpack.c.h.b16 %v23
  %v58 = vunpack.c.l.b16 %v24
  %v59 = vunpack.c.h.b16 %v24
  %v60 = vpack.c.b16 %v54, %v52
  %v61 = vpack.c.b16 %v55, %v53
  %v62 = vpack.c.b16 %v58, %v56
  %v63 = vpack.c.b16 %v59, %v57
  %v85 = vunpack.c.l.b16 %v29
  %v86 = vunpack.c.l.b16 %v30
  %v87 = vunpack.c.l.b16 %v31
  %v88 = vunpack.c.l.b16 %v32
  %v89 = vunpack.c.l.b16 %v33
  %v90 = vunpack.c.l.b16 %v34
  %v91 = vunpack.c.l.b16 %v35
  %v92 = vunpack.c.l.b16 %v36
  %v93 = vunpack.c.l.b16 %v37
  %v94 = vunpack.c.l.b16 %v38
  %v95 = vunpack.c.l.b16 %v39
  %v96 = vunpack.c.l.b16 %v40
  %v97 = vunpack.c.l.b16 %v41
  %v98 = vunpack.c.l.b16 %v42
  %v99 = vunpack.c.l.b16 %v43
  %v100 = vunpack.c.l.b16 %v44
  %v101 = vunpack.c.l.b16 %v45
  %v102 = vunpack.c.l.b16 %v46
  %v103 = vunpack.c.l.b16 %v47
  %v104 = vpack.c.b16 %v86, %v85
  %v105 = vpack.c.b16 %v88, %v87
  %v106 = vpack.c.b16 %v90, %v89
  %v107 = vpack.c.b16 %v92, %v91
  %v108 = vpack.c.b16 %v94, %v93
  %v109 = vpack.c.b16 %v96, %v95
  %v110 = vpack.c.b16 %v98, %v97
  %v111 = vpack.c.b16 %v100, %v99
  %v112 = vpack.c.b16 %v102, %v101
  %v113 = vpack.c.b16 %v103, %v103
  %vm123 = vcmask 154624
  %v125 = vsel %vm123, %v61, 0
  %v128 = vsel %vm123, %v63, 0
  %vm130 = vcmask 1040384
  %vm131 = vcmask 1041408
  %v132 = vsel %vm130, 4294967295, 65535
  %v133 = vsel %vm131, %v132, 0
  %v135 = vand.u32 %v113, %v133
  %137 = vmatpush.bf16.msra.mxu0 %v111
  %138 = vmatpush.bf16.msra.mxu0 %v110
  %139 = vmatpush.bf16.msra.mxu0 %v109
  %140 = vmatpush.bf16.msra.mxu0 %v108
  %141 = vmatpush.bf16.msra.mxu0 %v107
  %142 = vmatpush.bf16.msra.mxu0 %v106
  %143 = vmatpush.bf16.msra.mxu0 %v105
  %144 = vmatpush.bf16.msra.mxu0 %v104
  %145 = vmatmul.bf16.gmra.mxu0 %v60
  %v146 = vpop.f32.mrf.mxu0
  %v147 = vadd.f32 0.0, %v146
  %v148 = vpop.f32.mrf.mxu0
  %v149 = vadd.f32 0.0, %v148
  %150 = vmatmul.bf16.gmra.mxu0 %v62
  %v151 = vpop.f32.mrf.mxu0
  %v152 = vadd.f32 0.0, %v151
  %v153 = vpop.f32.mrf.mxu0
  %v154 = vadd.f32 0.0, %v153
  %155 = vdwg.mxu0
  %156 = vmatpush.bf16.msra.mxu0 0
  %157 = vmatpush.bf16.msra.mxu0 0
  %158 = vmatpush.bf16.msra.mxu0 0
  %159 = vmatpush.bf16.msra.mxu0 0
  %160 = vmatpush.bf16.msra.mxu0 0
  %161 = vmatpush.bf16.msra.mxu0 0
  %162 = vmatpush.bf16.msra.mxu0 %v135
  %163 = vmatpush.bf16.msra.mxu0 %v112
  %164 = vmatmul.bf16.gmra.mxu0 %v125
  %v165 = vpop.f32.mrf.mxu0
  %v166 = vadd.f32 %v147, %v165
  %v167 = vpop.f32.mrf.mxu0
  %v168 = vadd.f32 %v149, %v167
  %169 = vmatmul.bf16.gmra.mxu0 %v128
  %v170 = vpop.f32.mrf.mxu0
  %v171 = vadd.f32 %v152, %v170
  %v172 = vpop.f32.mrf.mxu0
  %v173 = vadd.f32 %v154, %v172
  %174 = vdwg.mxu0
  %v175 = vadd.f32 %v25, %v166
  %v176 = vadd.f32 %v26, %v168
  %v177 = vadd.f32 %v27, %v171
  %v178 = vadd.f32 %v28, %v173
  %vm179 = vcmask 130048
  %180 = vst.msk [vmem:[#allocation2] sm:$0xff] %vm179, %v175
  %181 = vst.msk [vmem:[#allocation2 + $0x8] sm:$0xff] %vm179, %v176
  %182 = vst.msk [vmem:[#allocation2 + $0x10] sm:$0xff] %vm179, %v177
  %183 = vst.msk [vmem:[#allocation2 + $0x18] sm:$0xff] %vm179, %v178
  // Predicated region
  $region14: #{tpu_custom_call.1} parent=0 // pred_check
    %p184 = pneg %p12
  $region15: #{tpu_custom_call.1} parent=0 // pred_check_branch
    %186 = sbr.rel (%p184) target = $region17
  $region16: #{tpu_custom_call.1} parent=0 // pred_region
    %v187 = vld [vmem:[#allocation2] sm:$0xff]
    %v188 = vld [vmem:[#allocation2 + $0x8] sm:$0xff]
    %v189 = vld [vmem:[#allocation2 + $0x10] sm:$0xff]
    %v190 = vld [vmem:[#allocation2 + $0x18] sm:$0xff]
    %191 = vst.msk [vmem:[%s2] sm:$0xff] %vm179, %v187
    %192 = vst.msk [vmem:[%s2 + $0x8] sm:$0xff] %vm179, %v188
    %193 = vst.msk [vmem:[%s2 + $0x10] sm:$0xff] %vm179, %v189
    %194 = vst.msk [vmem:[%s2 + $0x18] sm:$0xff] %vm179, %v190
  $region17: #{tpu_custom_call.1} parent=0 // pred_fallthru
    _
  // Predicated region
  $region18: #{tpu_custom_call.1} parent=0 // pred_check
    _
  $region19: #{tpu_custom_call.1} parent=0 // pred_check_branch
    %196 = sbr.rel (0) target = $region21
  $region20: #{tpu_custom_call.1} parent=0 // pred_region
    _
  $region21: #{tpu_custom_call.1} parent=0 // pred_fallthru
    _
  // Predicated region
  $region22: #{tpu_custom_call.1} parent=0 // pred_check
    _
  $region23: #{tpu_custom_call.1} parent=0 // pred_check_branch
    %198 = sbr.rel (0) target = $region25
  $region24: #{tpu_custom_call.1} parent=0 // pred_region
    _
  $region25: #{tpu_custom_call.1} parent=0 // pred_fallthru
    _

</llo_original>
